<compile_context>
chip_gen: v7x
topology: tpu7x:2x2x1
jax: 0.10.0
libtpu: 0.0.40
codegen_flags: <defaults>
</compile_context>

<pallas_src>
import jax
import jax.numpy as jnp
from jax.experimental import pallas as pl
from jax.experimental.pallas import tpu as pltpu

# ---- arch constants (deterministic, in-script) ----
FIX_ALPHA_STEPS = 0      # alpha fixing disabled (condition in forward is kept)
FIX_ALPHA_VALUE = 0.1

_VMEM_IO_BUDGET = 16 * 1024 * 1024   # target for double-buffered HBM<->VMEM IO
_VMEM_LIMIT_BYTES = 48 * 1024 * 1024  # safe on v7x (64 MiB physical VMEM)


def _space_kernel(x_ref, fg_ref, bg_ref, alpha_ref, fg_ll_ref, bg_ll_ref,
                  y_ref, ll_ref, mse_ref):
    """One grid step = TN (b, t) slices, lane-dense rows of length C*HW."""
    f32 = jnp.float32
    chw = x_ref.shape[-1]
    hw = alpha_ref.shape[-1]
    c = chw // hw

    alpha = alpha_ref[...].astype(f32)                       # (TN, HW)
    # compute the log terms once per pixel, then replicate across channels
    log_a = jnp.log(alpha + 1e-5)
    log_1ma = jnp.log(1.0 - alpha + 1e-5)
    alpha_c = jnp.concatenate([alpha] * c, axis=-1)          # (TN, C*HW)
    log_a_c = jnp.concatenate([log_a] * c, axis=-1)
    log_1ma_c = jnp.concatenate([log_1ma] * c, axis=-1)

    # fg/bg log-likelihoods mixed with alpha; 2-component logsumexp
    fl = fg_ll_ref[...].astype(f32) + log_a_c
    bl = bg_ll_ref[...].astype(f32) + log_1ma_c
    ll_pix = jnp.logaddexp(fl, bl)                           # max + log1p(exp)
    ll_ref[...] = jnp.sum(ll_pix, axis=-1, keepdims=True)    # (TN, 1)

    # composite image
    fg = fg_ref[...].astype(f32)
    bg = bg_ref[...].astype(f32)
    y = alpha_c * fg + (1.0 - alpha_c) * bg
    y_ref[...] = y.astype(y_ref.dtype)

    # mse = ((y - x) ** 2).flatten(2).sum(2)
    diff = y - x_ref[...].astype(f32)
    mse_ref[...] = jnp.sum(diff * diff, axis=-1, keepdims=True)


def _choose_tile(n, chw, hw, itemsize):
    """Pick rows-per-grid-step so double-buffered IO fits the VMEM budget."""
    # per-slice bytes crossing HBM<->VMEM: 5 full-image inputs + alpha + y + 2 stats
    bytes_per_row = (5 * chw + hw + chw + 2) * itemsize
    tn = _VMEM_IO_BUDGET // (2 * bytes_per_row)              # x2: double buffering
    tn = int(max(8, min(tn, 512)))
    tn = (tn // 8) * 8                                       # sublane alignment
    if tn >= n:
        return n, n                                          # single whole-batch tile
    n_pad = pl.cdiv(n, tn) * tn
    return tn, n_pad


def _space_pallas(x, fg, bg, alpha, fg_ll, bg_ll):
    n, chw = x.shape
    hw = alpha.shape[-1]
    itemsize = max(jnp.dtype(x.dtype).itemsize, 4)
    tn, n_pad = _choose_tile(n, chw, hw, itemsize)

    if n_pad != n:
        pad = [(0, n_pad - n), (0, 0)]
        x = jnp.pad(x, pad)
        fg = jnp.pad(fg, pad)
        bg = jnp.pad(bg, pad)
        alpha = jnp.pad(alpha, pad)
        fg_ll = jnp.pad(fg_ll, pad)
        bg_ll = jnp.pad(bg_ll, pad)

    vspec = pl.BlockSpec((tn, chw), lambda i: (i, 0))
    aspec = pl.BlockSpec((tn, hw), lambda i: (i, 0))
    sspec = pl.BlockSpec((tn, 1), lambda i: (i, 0))

    out_shape = (
        jax.ShapeDtypeStruct((n_pad, chw), x.dtype),     # y
        jax.ShapeDtypeStruct((n_pad, 1), jnp.float32),   # log_like per slice
        jax.ShapeDtypeStruct((n_pad, 1), jnp.float32),   # mse per slice
    )
    y, ll, mse = pl.pallas_call(
        _space_kernel,
        grid=(n_pad // tn,),
        in_specs=[vspec, vspec, vspec, aspec, vspec, vspec],
        out_specs=(vspec, sspec, sspec),
        out_shape=out_shape,
        compiler_params=pltpu.CompilerParams(
            dimension_semantics=("parallel",),
            vmem_limit_bytes=_VMEM_LIMIT_BYTES),
    )(x, fg, bg, alpha, fg_ll, bg_ll)
    return y[:n], ll[:n, 0], mse[:n, 0]


def space_forward(x, global_step, fg, bg, alpha_map, fg_likelihood,
                  bg_likelihood, kl_bg, kl_fg, loss_boundary):
    """Mirrors Space.forward given the submodule outputs."""
    B, T, C, H, W = x.shape
    N, HW, CHW = B * T, H * W, C * H * W

    # Mirrors PyTorch: `if global_step and global_step < arch.fix_alpha_steps`
    # (global_step must be a static Python int here, as in the PyTorch loop).
    if global_step and global_step < FIX_ALPHA_STEPS:
        alpha_map = jnp.full_like(alpha_map, FIX_ALPHA_VALUE)

    y_r, ll_v, mse_v = _space_pallas(
        x.reshape(N, CHW),
        fg.reshape(N, CHW),
        bg.reshape(N, CHW),
        alpha_map.reshape(N, HW),
        fg_likelihood.reshape(N, CHW),
        bg_likelihood.reshape(N, CHW),
    )

    y = y_r.reshape(B, T, C, H, W)
    log_like = ll_v.reshape(B, T)
    mse = mse_v.reshape(B, T)

    # per-(b,t) scalar math is free in XLA; keep it out of the kernel
    elbo = log_like - kl_bg - kl_fg
    loss = jnp.mean(-elbo + loss_boundary)

    log = {'imgs': x, 'y': y, 'mse': mse, 'log_like': log_like, 'loss': loss}
    return loss, log


def _reference(x, global_step, fg, bg, alpha_map, fg_ll, bg_ll,
               kl_bg, kl_fg, loss_boundary):
    """Pure-JAX transcription of the PyTorch forward, for verification."""
    if global_step and global_step < FIX_ALPHA_STEPS:
        alpha_map = jnp.full_like(alpha_map, FIX_ALPHA_VALUE)
    fg_ll = fg_ll + jnp.log(alpha_map + 1e-5)
    bg_ll = bg_ll + jnp.log(1 - alpha_map + 1e-5)
    log_like = jnp.logaddexp(fg_ll, bg_ll)
    log_like = log_like.reshape(*log_like.shape[:2], -1).sum(2)
    y = alpha_map * fg + (1.0 - alpha_map) * bg
    elbo = log_like - kl_bg - kl_fg
    loss = jnp.mean(-elbo + loss_boundary)
    mse = ((y - x) ** 2).reshape(*x.shape[:2], -1).sum(2)
    return loss, y, log_like, mse


if __name__ == "__main__":
    B, T, C, H, W = 2, 2, 3, 16, 16
    global_step = 1000

    key = jax.random.PRNGKey(0)
    ks = jax.random.split(key, 8)

    x = jax.random.uniform(ks[0], (B, T, C, H, W), jnp.float32)
    # ---- deterministic synthetic SpaceFg / SpaceBg outputs ----
    fg = jax.random.uniform(ks[1], (B, T, C, H, W), jnp.float32)
    bg = jax.random.uniform(ks[2], (B, T, C, H, W), jnp.float32)
    alpha_map = jax.nn.sigmoid(jax.random.normal(ks[3], (B, T, 1, H, W)))
    sigma = 0.15
    fg_likelihood = (-0.5 * ((x - fg) / sigma) ** 2
                     - jnp.log(sigma) - 0.5 * jnp.log(2 * jnp.pi))
    bg_likelihood = (-0.5 * ((x - bg) / sigma) ** 2
                     - jnp.log(sigma) - 0.5 * jnp.log(2 * jnp.pi))
    kl_fg = jax.nn.softplus(jax.random.normal(ks[4], (B, T))) * 10.0
    kl_bg = jax.nn.softplus(jax.random.normal(ks[5], (B, T))) * 10.0
    loss_boundary = jax.nn.softplus(jax.random.normal(ks[6], (B, T))) * 0.01

    loss, log = space_forward(x, global_step, fg, bg, alpha_map,
                              fg_likelihood, bg_likelihood,
                              kl_bg, kl_fg, loss_boundary)
    jax.block_until_ready(loss)
    jax.block_until_ready(log['y'])

    # verify against pure-JAX reference
    ref_loss, ref_y, ref_ll, ref_mse = _reference(
        x, global_step, fg, bg, alpha_map, fg_likelihood, bg_likelihood,
        kl_bg, kl_fg, loss_boundary)
    assert jnp.allclose(loss, ref_loss, rtol=1e-4, atol=1e-3)
    assert jnp.allclose(log['y'], ref_y, rtol=1e-5, atol=1e-5)
    assert jnp.allclose(log['log_like'], ref_ll, rtol=1e-4, atol=1e-3)
    assert jnp.allclose(log['mse'], ref_mse, rtol=1e-4, atol=1e-3)

    print("KERNEL_OK")
</pallas_src>

<mosaic_0001>
module attributes {stable_mosaic.version = 11 : i64} {
  func.func @_space_kernel(%arg0: i32, %arg1: memref<4x768xf32, #tpu.memory_space<vmem>>, %arg2: memref<4x768xf32, #tpu.memory_space<vmem>>, %arg3: memref<4x768xf32, #tpu.memory_space<vmem>>, %arg4: memref<4x256xf32, #tpu.memory_space<vmem>>, %arg5: memref<4x768xf32, #tpu.memory_space<vmem>>, %arg6: memref<4x768xf32, #tpu.memory_space<vmem>>, %arg7: memref<4x768xf32, #tpu.memory_space<vmem>>, %arg8: memref<4x1xf32, #tpu.memory_space<vmem>>, %arg9: memref<4x1xf32, #tpu.memory_space<vmem>>) attributes {dimension_semantics = [#tpu.dimension_semantics<parallel>], iteration_bounds = array<i64: 1>, scalar_prefetch = 0 : i64, scratch_operands = 0 : i64, tpu.core_type = #tpu.core_type<tc>, window_params = [{transform_indices = @transform_0, window_bounds = array<i64: 4, 768>}, {transform_indices = @transform_1, window_bounds = array<i64: 4, 768>}, {transform_indices = @transform_2, window_bounds = array<i64: 4, 768>}, {transform_indices = @transform_3, window_bounds = array<i64: 4, 256>}, {transform_indices = @transform_4, window_bounds = array<i64: 4, 768>}, {transform_indices = @transform_5, window_bounds = array<i64: 4, 768>}, {transform_indices = @transform_6, window_bounds = array<i64: 4, 768>}, {transform_indices = @transform_7, window_bounds = array<i64: 4, 1>}, {transform_indices = @transform_8, window_bounds = array<i64: 4, 1>}]} {
    %c0 = arith.constant 0 : index
    %c0_0 = arith.constant 0 : index
    %0 = vector.load %arg4[%c0, %c0_0] : memref<4x256xf32, #tpu.memory_space<vmem>>, vector<4x256xf32>
    %cst = arith.constant 9.99999974E-6 : f32
    %1 = vector.broadcast %cst : f32 to vector<4x256xf32>
    %2 = arith.addf %0, %1 : vector<4x256xf32>
    %3 = math.log %2 : vector<4x256xf32>
    %cst_1 = arith.constant 1.000000e+00 : f32
    %4 = vector.broadcast %cst_1 : f32 to vector<4x256xf32>
    %5 = arith.subf %4, %0 : vector<4x256xf32>
    %cst_2 = arith.constant 9.99999974E-6 : f32
    %6 = vector.broadcast %cst_2 : f32 to vector<4x256xf32>
    %7 = arith.addf %5, %6 : vector<4x256xf32>
    %8 = math.log %7 : vector<4x256xf32>
    %9 = tpu.concatenate %0, %0, %0 in 1 : vector<4x256xf32>, vector<4x256xf32>, vector<4x256xf32> -> vector<4x768xf32>
    %10 = tpu.concatenate %3, %3, %3 in 1 : vector<4x256xf32>, vector<4x256xf32>, vector<4x256xf32> -> vector<4x768xf32>
    %11 = tpu.concatenate %8, %8, %8 in 1 : vector<4x256xf32>, vector<4x256xf32>, vector<4x256xf32> -> vector<4x768xf32>
    %c0_3 = arith.constant 0 : index
    %c0_4 = arith.constant 0 : index
    %12 = vector.load %arg5[%c0_3, %c0_4] : memref<4x768xf32, #tpu.memory_space<vmem>>, vector<4x768xf32>
    %13 = arith.addf %12, %10 : vector<4x768xf32>
    %c0_5 = arith.constant 0 : index
    %c0_6 = arith.constant 0 : index
    %14 = vector.load %arg6[%c0_5, %c0_6] : memref<4x768xf32, #tpu.memory_space<vmem>>, vector<4x768xf32>
    %15 = arith.addf %14, %11 : vector<4x768xf32>
    %16 = arith.maximumf %13, %15 : vector<4x768xf32>
    %17 = arith.subf %13, %15 : vector<4x768xf32>
    %18 = arith.cmpf one, %17, %17 : vector<4x768xf32>
    %19 = arith.addf %13, %15 : vector<4x768xf32>
    %20 = math.absf %17 : vector<4x768xf32>
    %cst_7 = arith.constant 0.000000e+00 : f32
    %21 = vector.broadcast %cst_7 : f32 to vector<4x768xf32>
    %22 = arith.subf %21, %20 : vector<4x768xf32>
    %23 = math.exp %22 : vector<4x768xf32>
    %24 = math.log1p %23 : vector<4x768xf32>
    %25 = arith.addf %16, %24 : vector<4x768xf32>
    %26 = arith.select %18, %19, %25 : vector<4x768xi1>, vector<4x768xf32>
    %cst_8 = arith.constant dense<0.000000e+00> : vector<4xf32>
    %27 = vector.multi_reduction <add>, %26, %cst_8 [1] : vector<4x768xf32> to vector<4xf32>
    %28 = vector.shape_cast %27 : vector<4xf32> to vector<4x1xf32>
    %c0_9 = arith.constant 0 : index
    %c0_10 = arith.constant 0 : index
    %29 = vector.load %arg8[%c0_9, %c0_10] : memref<4x1xf32, #tpu.memory_space<vmem>>, vector<4x1xf32>
    tpu.vector_store %arg8[%c0_9, %c0_10], %28 {strides = array<i32>} : memref<4x1xf32, #tpu.memory_space<vmem>>, vector<4x1xf32>,
    %c0_11 = arith.constant 0 : index
    %c0_12 = arith.constant 0 : index
    %30 = vector.load %arg2[%c0_11, %c0_12] : memref<4x768xf32, #tpu.memory_space<vmem>>, vector<4x768xf32>
    %c0_13 = arith.constant 0 : index
    %c0_14 = arith.constant 0 : index
    %31 = vector.load %arg3[%c0_13, %c0_14] : memref<4x768xf32, #tpu.memory_space<vmem>>, vector<4x768xf32>
    %32 = arith.mulf %9, %30 : vector<4x768xf32>
    %cst_15 = arith.constant 1.000000e+00 : f32
    %33 = vector.broadcast %cst_15 : f32 to vector<4x768xf32>
    %34 = arith.subf %33, %9 : vector<4x768xf32>
    %35 = arith.mulf %34, %31 : vector<4x768xf32>
    %36 = arith.addf %32, %35 : vector<4x768xf32>
    %c0_16 = arith.constant 0 : index
    %c0_17 = arith.constant 0 : index
    %37 = vector.load %arg7[%c0_16, %c0_17] : memref<4x768xf32, #tpu.memory_space<vmem>>, vector<4x768xf32>
    tpu.vector_store %arg7[%c0_16, %c0_17], %36 {strides = array<i32>} : memref<4x768xf32, #tpu.memory_space<vmem>>, vector<4x768xf32>,
    %c0_18 = arith.constant 0 : index
    %c0_19 = arith.constant 0 : index
    %38 = vector.load %arg1[%c0_18, %c0_19] : memref<4x768xf32, #tpu.memory_space<vmem>>, vector<4x768xf32>
    %39 = arith.subf %36, %38 : vector<4x768xf32>
    %40 = arith.mulf %39, %39 : vector<4x768xf32>
    %cst_20 = arith.constant dense<0.000000e+00> : vector<4xf32>
    %41 = vector.multi_reduction <add>, %40, %cst_20 [1] : vector<4x768xf32> to vector<4xf32>
    %42 = vector.shape_cast %41 : vector<4xf32> to vector<4x1xf32>
    %c0_21 = arith.constant 0 : index
    %c0_22 = arith.constant 0 : index
    %43 = vector.load %arg9[%c0_21, %c0_22] : memref<4x1xf32, #tpu.memory_space<vmem>>, vector<4x1xf32>
    tpu.vector_store %arg9[%c0_21, %c0_22], %42 {strides = array<i32>} : memref<4x1xf32, #tpu.memory_space<vmem>>, vector<4x1xf32>,
    return
  }
  func.func @transform_0(%arg0: i32) -> (i32, i32) {
    %c0_i32 = arith.constant 0 : i32
    %c0_i32_0 = arith.constant 0 : i32
    return %arg0, %c0_i32 : i32, i32
  }
  func.func @transform_1(%arg0: i32) -> (i32, i32) {
    %c0_i32 = arith.constant 0 : i32
    %c0_i32_0 = arith.constant 0 : i32
    return %arg0, %c0_i32 : i32, i32
  }
  func.func @transform_2(%arg0: i32) -> (i32, i32) {
    %c0_i32 = arith.constant 0 : i32
    %c0_i32_0 = arith.constant 0 : i32
    return %arg0, %c0_i32 : i32, i32
  }
  func.func @transform_3(%arg0: i32) -> (i32, i32) {
    %c0_i32 = arith.constant 0 : i32
    %c0_i32_0 = arith.constant 0 : i32
    return %arg0, %c0_i32 : i32, i32
  }
  func.func @transform_4(%arg0: i32) -> (i32, i32) {
    %c0_i32 = arith.constant 0 : i32
    %c0_i32_0 = arith.constant 0 : i32
    return %arg0, %c0_i32 : i32, i32
  }
  func.func @transform_5(%arg0: i32) -> (i32, i32) {
    %c0_i32 = arith.constant 0 : i32
    %c0_i32_0 = arith.constant 0 : i32
    return %arg0, %c0_i32 : i32, i32
  }
  func.func @transform_6(%arg0: i32) -> (i32, i32) {
    %c0_i32 = arith.constant 0 : i32
    %c0_i32_0 = arith.constant 0 : i32
    return %arg0, %c0_i32 : i32, i32
  }
  func.func @transform_7(%arg0: i32) -> (i32, i32) {
    %c0_i32 = arith.constant 0 : i32
    %c0_i32_0 = arith.constant 0 : i32
    return %arg0, %c0_i32 : i32, i32
  }
  func.func @transform_8(%arg0: i32) -> (i32, i32) {
    %c0_i32 = arith.constant 0 : i32
    %c0_i32_0 = arith.constant 0 : i32
    return %arg0, %c0_i32 : i32, i32
  }
}

</mosaic_0001>

<llo_original>
// kernel: tpu_custom_call.1
$region0: #{tpu_custom_call.1}
  #allocation0 [shape = 'u32[]', space=smem, size = 0x4, offset = 0x4, fixed_abs, tag = 'smem constant byte address 0x4 - core index']
  #allocation1 [shape = 'u32[144,128]{1,0:T(1,128)}', space=vmem, size = 0x12000, scoped, tag = 'internal scratch']
  %s0 = inlined_call_operand.hbm [shape: f32[4,768], index: 0, kind: input, shape index: {}]
  %s1 = inlined_call_operand.hbm [shape: f32[4,768], index: 1, kind: input, shape index: {}]
  %s2 = inlined_call_operand.hbm [shape: f32[4,768], index: 2, kind: input, shape index: {}]
  %s3 = inlined_call_operand.vmem [shape: f32[4,256], index: 3, kind: input, shape index: {}]
  %s4 = inlined_call_operand.hbm [shape: f32[4,768], index: 4, kind: input, shape index: {}]
  %s5 = inlined_call_operand.hbm [shape: f32[4,768], index: 5, kind: input, shape index: {}]
  %s6 = inlined_call_operand.hbm [shape: f32[4,768], index: 6, kind: output, shape index: {0}]
  %s7 = inlined_call_operand.vmem [shape: f32[4,1], index: 7, kind: output, shape index: {1}]
  %s8 = inlined_call_operand.vmem [shape: f32[4,1], index: 8, kind: output, shape index: {2}]
  %9 = xla_tuple %s6, %s7, %s8
  %s10 = sld [smem:[#allocation0]]
  $region70: #{tpu_custom_call.1} parent=0
    _
  %s12 = ssub.s32 1, %s10
  %s13 = scalar_select 0, %s12, %s10
  $region1: #{tpu_custom_call.1} parent=0
    #allocation2 [shape = 'u8[12288]{0}', space=vmem, size = 0x3000, scoped, tag = 'input window, operand 0, single buffered']
    #allocation3 [shape = 's32[1]{0}', space=sflag, size = 0x4, scoped, tag = 'scoped memory for tpu_custom_call.1']
    #allocation4 [shape = 's32[1]{0}', space=sflag, size = 0x4, scoped, tag = 'scoped memory for tpu_custom_call.1']
    #allocation5 [shape = 'u8[12288]{0}', space=vmem, size = 0x3000, scoped, tag = 'input window, operand 1, single buffered']
    #allocation6 [shape = 's32[1]{0}', space=sflag, size = 0x4, scoped, tag = 'scoped memory for tpu_custom_call.1']
    #allocation7 [shape = 'u8[12288]{0}', space=vmem, size = 0x3000, scoped, tag = 'input window, operand 2, single buffered']
    #allocation8 [shape = 'u8[12288]{0}', space=vmem, size = 0x3000, scoped, tag = 'input window, operand 4, single buffered']
    #allocation9 [shape = 's32[1]{0}', space=sflag, size = 0x4, scoped, tag = 'scoped memory for tpu_custom_call.1']
    #allocation10 [shape = 'u8[12288]{0}', space=vmem, size = 0x3000, scoped, tag = 'input window, operand 5, single buffered']
    #allocation11 [shape = 'u8[12288]{0}', space=vmem, size = 0x3000, scoped, tag = 'output window, operand 0, single buffered']
    %14 = vsyncpa [#allocation3], 0
    %15 = vsyncpa [#allocation6], 0
    %16 = vsyncpa [#allocation9], 0
    %17 = vsyncpa [#allocation4], 0
    // Predicated region
    $region2: #{tpu_custom_call.1} parent=1 // pred_check
      _
    $region3: #{tpu_custom_call.1} parent=1 // pred_check_branch
      %19 = sbr.rel (0) target = $region5
    $region4: #{tpu_custom_call.1} parent=1 // pred_region
      %s21 = ssub.s32 384, 384
      %22 = vsyncadd [#allocation3], %s21
      %s24 = sshll.u32 [#allocation2], 4
      %s25 = int_to_ptr.vmem [resolvable:$true] %s24
      %27 = dma.hbm_to_vmem [thread:$0]  %s0, 384, %s25, [#allocation3]
    $region5: #{tpu_custom_call.1} parent=1 // pred_fallthru
      _
    // Predicated region
    $region6: #{tpu_custom_call.1} parent=1 // pred_check
      _
    $region7: #{tpu_custom_call.1} parent=1 // pred_check_branch
      %29 = sbr.rel (0) target = $region9
    $region8: #{tpu_custom_call.1} parent=1 // pred_region
      %s31 = ssub.s32 384, 384
      %32 = vsyncadd [#allocation6], %s31
      %s34 = sshll.u32 [#allocation5], 4
      %s35 = int_to_ptr.vmem [resolvable:$true] %s34
      %37 = dma.hbm_to_vmem [thread:$0]  %s1, 384, %s35, [#allocation6]
    $region9: #{tpu_custom_call.1} parent=1 // pred_fallthru
      _
    // Predicated region
    $region10: #{tpu_custom_call.1} parent=1 // pred_check
      _
    $region11: #{tpu_custom_call.1} parent=1 // pred_check_branch
      %39 = sbr.rel (0) target = $region13
    $region12: #{tpu_custom_call.1} parent=1 // pred_region
      %s41 = ssub.s32 384, 384
      %42 = vsyncadd [#allocation6], %s41
      %s44 = sshll.u32 [#allocation7], 4
      %s45 = int_to_ptr.vmem [resolvable:$true] %s44
      %47 = dma.hbm_to_vmem [thread:$0]  %s2, 384, %s45, [#allocation6]
    $region13: #{tpu_custom_call.1} parent=1 // pred_fallthru
      _
    // Predicated region
    $region14: #{tpu_custom_call.1} parent=1 // pred_check
      _
    $region15: #{tpu_custom_call.1} parent=1 // pred_check_branch
      %49 = sbr.rel (0) target = $region17
    $region16: #{tpu_custom_call.1} parent=1 // pred_region
      _
    $region17: #{tpu_custom_call.1} parent=1 // pred_fallthru
      _
    // Predicated region
    $region18: #{tpu_custom_call.1} parent=1 // pred_check
      _
    $region19: #{tpu_custom_call.1} parent=1 // pred_check_branch
      %51 = sbr.rel (0) target = $region21
    $region20: #{tpu_custom_call.1} parent=1 // pred_region
      %s53 = ssub.s32 384, 384
      %54 = vsyncadd [#allocation9], %s53
      %s56 = sshll.u32 [#allocation8], 4
      %s57 = int_to_ptr.vmem [resolvable:$true] %s56
      %59 = dma.hbm_to_vmem [thread:$0]  %s4, 384, %s57, [#allocation9]
    $region21: #{tpu_custom_call.1} parent=1 // pred_fallthru
      _
    // Predicated region
    $region22: #{tpu_custom_call.1} parent=1 // pred_check
      _
    $region23: #{tpu_custom_call.1} parent=1 // pred_check_branch
      %61 = sbr.rel (0) target = $region25
    $region24: #{tpu_custom_call.1} parent=1 // pred_region
      %s63 = ssub.s32 384, 384
      %64 = vsyncadd [#allocation9], %s63
      %s66 = sshll.u32 [#allocation10], 4
      %s67 = int_to_ptr.vmem [resolvable:$true] %s66
      %69 = dma.hbm_to_vmem [thread:$0]  %s5, 384, %s67, [#allocation9]
    $region25: #{tpu_custom_call.1} parent=1 // pred_fallthru
      _
    // Predicated region
    $region26: #{tpu_custom_call.1} parent=1 // pred_check
      _
    $region27: #{tpu_custom_call.1} parent=1 // pred_check_branch
      %71 = sbr.rel (0) target = $region29
    $region28: #{tpu_custom_call.1} parent=1 // pred_region
      %72 = dma.done [#allocation3], 384
    $region29: #{tpu_custom_call.1} parent=1 // pred_fallthru
      _
    // Predicated region
    $region30: #{tpu_custom_call.1} parent=1 // pred_check
      _
    $region31: #{tpu_custom_call.1} parent=1 // pred_check_branch
      %74 = sbr.rel (0) target = $region33
    $region32: #{tpu_custom_call.1} parent=1 // pred_region
      %75 = dma.done [#allocation6], 384
    $region33: #{tpu_custom_call.1} parent=1 // pred_fallthru
      _
    // Predicated region
    $region34: #{tpu_custom_call.1} parent=1 // pred_check
      _
    $region35: #{tpu_custom_call.1} parent=1 // pred_check_branch
      %77 = sbr.rel (0) target = $region37
    $region36: #{tpu_custom_call.1} parent=1 // pred_region
      %78 = dma.done [#allocation6], 384
    $region37: #{tpu_custom_call.1} parent=1 // pred_fallthru
      _
    // Predicated region
    $region38: #{tpu_custom_call.1} parent=1 // pred_check
      _
    $region39: #{tpu_custom_call.1} parent=1 // pred_check_branch
      %80 = sbr.rel (0) target = $region41
    $region40: #{tpu_custom_call.1} parent=1 // pred_region
      %81 = dma.done [#allocation9], 384
    $region41: #{tpu_custom_call.1} parent=1 // pred_fallthru
      _
    // Predicated region
    $region42: #{tpu_custom_call.1} parent=1 // pred_check
      _
    $region43: #{tpu_custom_call.1} parent=1 // pred_check_branch
      %83 = sbr.rel (0) target = $region45
    $region44: #{tpu_custom_call.1} parent=1 // pred_region
      %84 = dma.done [#allocation9], 384
    $region45: #{tpu_custom_call.1} parent=1 // pred_fallthru
      _
    %v85 = vld [vmem:[%s3] sm:$0xff]
    %v86 = vadd.f32 %v85, 1e-05
    %v87 = vlog2.pop %v86
    %v88 = vmul.f32 %v87, 0.6931472
    %v89 = vsub.f32 1.0, %v85
    %v90 = vadd.f32 %v89, 1e-05
    %v91 = vlog2.pop %v90
    %v92 = vmul.f32 %v91, 0.6931472
    %v94 = vcombine.high %v85, %v85
    %v97 = vcombine.high %v88, %v88
    %v99 = vcombine.high %v92, %v92
    %v100 = vld [vmem:[#allocation8] sm:$0xff]
    %v101 = vld [vmem:[#allocation8 + $0x8] sm:$0xff]
    %v102 = vld [vmem:[#allocation8 + $0x10] sm:$0xff]
    %v103 = vcombine.low %v88, %v97
    %v105 = vadd.f32 %v100, %v103
    %v106 = vadd.f32 %v101, %v103
    %v107 = vadd.f32 %v102, %v103
    %v108 = vld [vmem:[#allocation10] sm:$0xff]
    %v109 = vld [vmem:[#allocation10 + $0x8] sm:$0xff]
    %v110 = vld [vmem:[#allocation10 + $0x10] sm:$0xff]
    %v111 = vcombine.low %v92, %v99
    %v113 = vadd.f32 %v108, %v111
    %v114 = vadd.f32 %v109, %v111
    %v115 = vadd.f32 %v110, %v111
    %v116 = vmax.f32 %v105, %v113
    %v117 = vmax.f32 %v106, %v114
    %v118 = vmax.f32 %v107, %v115
    %v119 = vsub.f32 %v105, %v113
    %v120 = vsub.f32 %v106, %v114
    %v121 = vsub.f32 %v107, %v115
    %vm122 = vcmp.ne.f32.partialorder %v119, %v119
    %vm123 = vcmp.ne.f32.partialorder %v120, %v120
    %vm124 = vcmp.ne.f32.partialorder %v121, %v121
    %v125 = vadd.f32 %v105, %v113
    %v126 = vadd.f32 %v106, %v114
    %v127 = vadd.f32 %v107, %v115
    %v128 = vand.u32 2147483647, %v119
    %v129 = vand.u32 2147483647, %v120
    %v130 = vand.u32 2147483647, %v121
    %v131 = vsub.f32 0.0, %v128
    %v132 = vsub.f32 0.0, %v129
    %v133 = vsub.f32 0.0, %v130
    %v134 = vmul.f32 %v131, 1.442695
    %v135 = vpow.pop %v134
    %v136 = vmul.f32 %v132, 1.442695
    %v137 = vpow.pop %v136
    %v138 = vmul.f32 %v133, 1.442695
    %v139 = vpow.pop %v138
    %v140 = vadd.f32 %v135, 1.0
    %v141 = vlog2.pop %v140
    %v142 = vmul.f32 %v141, 0.6931472
    %v143 = vmul.f32 -0.5, %v135
    %v144 = vadd.f32 %v143, 1.0
    %v145 = vmul.f32 %v144, %v135
    %v146 = vand.u32 2147483647, %v135
    %vm147 = vcmp.lt.f32.partialorder %v146, 0.0004427343
    %v148 = vsel %vm147, %v145, %v142
    %v149 = vadd.f32 %v137, 1.0
    %v150 = vlog2.pop %v149
    %v151 = vmul.f32 %v150, 0.6931472
    %v152 = vmul.f32 -0.5, %v137
    %v153 = vadd.f32 %v152, 1.0
    %v154 = vmul.f32 %v153, %v137
    %v155 = vand.u32 2147483647, %v137
    %vm156 = vcmp.lt.f32.partialorder %v155, 0.0004427343
    %v157 = vsel %vm156, %v154, %v151
    %v158 = vadd.f32 %v139, 1.0
    %v159 = vlog2.pop %v158
    %v160 = vmul.f32 %v159, 0.6931472
    %v161 = vmul.f32 -0.5, %v139
    %v162 = vadd.f32 %v161, 1.0
    %v163 = vmul.f32 %v162, %v139
    %v164 = vand.u32 2147483647, %v139
    %vm165 = vcmp.lt.f32.partialorder %v164, 0.0004427343
    %v166 = vsel %vm165, %v163, %v160
    %v167 = vadd.f32 %v116, %v148
    %v168 = vadd.f32 %v117, %v157
    %v169 = vadd.f32 %v118, %v166
    %v170 = vsel %vm122, %v125, %v167
    %v171 = vsel %vm123, %v126, %v168
    %v172 = vsel %vm124, %v127, %v169
    %v176 = vcombine.high %v170, %v170
    %v177 = vcombine.high %v171, %v171
    %v178 = vcombine.high %v172, %v172
    %vm182 = vcmask 1043456
    %v183 = vsel %vm182, %v170, 0.0
    %v184 = vsel %vm182, %v176, 0.0
    %v185 = vadd.f32 %v183, %v184
    %v186 = vsel %vm182, %v171, 0.0
    %v187 = vadd.f32 %v185, %v186
    %v188 = vsel %vm182, %v177, 0.0
    %v189 = vadd.f32 %v187, %v188
    %v190 = vsel %vm182, %v172, 0.0
    %v191 = vadd.f32 %v189, %v190
    %v192 = vsel %vm182, %v178, 0.0
    %v193 = vadd.f32 %v191, %v192
    %194 = vadd.xlane.f32.xlu0 %v193
    %v195 = vpop.xlane.xlu0 %194
    %vm196 = vcmask 3072
    %197 = vst.msk [vmem:[%s7] sm:$0xf] %vm196, %v195
    %v198 = vld [vmem:[#allocation5] sm:$0xff]
    %v199 = vld [vmem:[#allocation5 + $0x8] sm:$0xff]
    %v200 = vld [vmem:[#allocation5 + $0x10] sm:$0xff]
    %v201 = vld [vmem:[#allocation7] sm:$0xff]
    %v202 = vld [vmem:[#allocation7 + $0x8] sm:$0xff]
    %v203 = vld [vmem:[#allocation7 + $0x10] sm:$0xff]
    %v207 = vcombine.high %v198, %v198
    %v208 = vcombine.high %v199, %v199
    %v209 = vcombine.high %v200, %v200
    %v213 = vmul.f32 %v85, %v198
    %v214 = vmul.f32 %v94, %v207
    %v215 = vmul.f32 %v85, %v199
    %v216 = vmul.f32 %v94, %v208
    %v217 = vmul.f32 %v85, %v200
    %v218 = vmul.f32 %v94, %v209
    %v219 = vsub.f32 1.0, %v94
    %v223 = vcombine.high %v201, %v201
    %v224 = vcombine.high %v202, %v202
    %v225 = vcombine.high %v203, %v203
    %v229 = vmul.f32 %v89, %v201
    %v230 = vmul.f32 %v219, %v223
    %v231 = vmul.f32 %v89, %v202
    %v232 = vmul.f32 %v219, %v224
    %v233 = vmul.f32 %v89, %v203
    %v234 = vmul.f32 %v219, %v225
    %v235 = vadd.f32 %v213, %v229
    %v236 = vadd.f32 %v214, %v230
    %v237 = vadd.f32 %v215, %v231
    %v238 = vadd.f32 %v216, %v232
    %v239 = vadd.f32 %v217, %v233
    %v240 = vadd.f32 %v218, %v234
    %v247 = vcombine.low %v235, %v236
    %v248 = vcombine.low %v237, %v238
    %v249 = vcombine.low %v239, %v240
    %253 = vst [vmem:[#allocation11] sm:$0xff] %v247
    %254 = vst [vmem:[#allocation11 + $0x8] sm:$0xff] %v248
    %255 = vst [vmem:[#allocation11 + $0x10] sm:$0xff] %v249
    %v256 = vld [vmem:[#allocation2] sm:$0xff]
    %v257 = vld [vmem:[#allocation2 + $0x8] sm:$0xff]
    %v258 = vld [vmem:[#allocation2 + $0x10] sm:$0xff]
    %v262 = vcombine.high %v256, %v256
    %v263 = vcombine.high %v257, %v257
    %v264 = vcombine.high %v258, %v258
    %v268 = vsub.f32 %v235, %v256
    %v269 = vsub.f32 %v236, %v262
    %v270 = vsub.f32 %v237, %v257
    %v271 = vsub.f32 %v238, %v263
    %v272 = vsub.f32 %v239, %v258
    %v273 = vsub.f32 %v240, %v264
    %v274 = vmul.f32 %v268, %v268
    %v275 = vmul.f32 %v269, %v269
    %v276 = vmul.f32 %v270, %v270
    %v277 = vmul.f32 %v271, %v271
    %v278 = vmul.f32 %v272, %v272
    %v279 = vmul.f32 %v273, %v273
    %v280 = vsel %vm182, %v274, 0.0
    %v281 = vsel %vm182, %v275, 0.0
    %v282 = vadd.f32 %v280, %v281
    %v283 = vsel %vm182, %v276, 0.0
    %v284 = vadd.f32 %v282, %v283
    %v285 = vsel %vm182, %v277, 0.0
    %v286 = vadd.f32 %v284, %v285
    %v287 = vsel %vm182, %v278, 0.0
    %v288 = vadd.f32 %v286, %v287
    %v289 = vsel %vm182, %v279, 0.0
    %v290 = vadd.f32 %v288, %v289
    %291 = vadd.xlane.f32.xlu0 %v290
    %v292 = vpop.xlane.xlu0 %291
    %293 = vst.msk [vmem:[%s8] sm:$0xf] %vm196, %v292
    // Predicated region
    $region46: #{tpu_custom_call.1} parent=1 // pred_check
      _
    $region47: #{tpu_custom_call.1} parent=1 // pred_check_branch
      %295 = sbr.rel (0) target = $region49
    $region48: #{tpu_custom_call.1} parent=1 // pred_region
      %s297 = ssub.s32 384, 384
      %298 = vsyncadd [#allocation4], %s297
      %s300 = sshll.u32 [#allocation11], 4
      %s301 = int_to_ptr.vmem [resolvable:$true] %s300
      %303 = dma.vmem_to_hbm [thread:$0]  %s301, 384, %s6, [#allocation4]
    $region49: #{tpu_custom_call.1} parent=1 // pred_fallthru
      _
    // Predicated region
    $region50: #{tpu_custom_call.1} parent=1 // pred_check
      _
    $region51: #{tpu_custom_call.1} parent=1 // pred_check_branch
      %305 = sbr.rel (0) target = $region53
    $region52: #{tpu_custom_call.1} parent=1 // pred_region
      _
    $region53: #{tpu_custom_call.1} parent=1 // pred_fallthru
      _
    // Predicated region
    $region54: #{tpu_custom_call.1} parent=1 // pred_check
      _
    $region55: #{tpu_custom_call.1} parent=1 // pred_check_branch
      %307 = sbr.rel (0) target = $region57
    $region56: #{tpu_custom_call.1} parent=1 // pred_region
      _
    $region57: #{tpu_custom_call.1} parent=1 // pred_fallthru
      _
    // Predicated region
    $region58: #{tpu_custom_call.1} parent=1 // pred_check
      _
    $region59: #{tpu_custom_call.1} parent=1 // pred_check_branch
      %309 = sbr.rel (0) target = $region61
    $region60: #{tpu_custom_call.1} parent=1 // pred_region
      %310 = dma.done [#allocation4], 384
    $region61: #{tpu_custom_call.1} parent=1 // pred_fallthru
      _
    // Predicated region
    $region62: #{tpu_custom_call.1} parent=1 // pred_check
      _
    $region63: #{tpu_custom_call.1} parent=1 // pred_check_branch
      %312 = sbr.rel (0) target = $region65
    $region64: #{tpu_custom_call.1} parent=1 // pred_region
      _
    $region65: #{tpu_custom_call.1} parent=1 // pred_fallthru
      _
    // Predicated region
    $region66: #{tpu_custom_call.1} parent=1 // pred_check
      _
    $region67: #{tpu_custom_call.1} parent=1 // pred_check_branch
      %314 = sbr.rel (0) target = $region69
    $region68: #{tpu_custom_call.1} parent=1 // pred_region
      _
    $region69: #{tpu_custom_call.1} parent=1 // pred_fallthru
      _
    %315 = vsyncpa [#allocation3], 1
    %316 = vsyncpa [#allocation6], 1
    %317 = vsyncpa [#allocation9], 1
    %318 = vsyncpa [#allocation4], 1

</llo_original>
